<compile_context>
chip_gen: v6e
topology: v6e:2x2x1
jax: 0.10.0
libtpu: 0.0.40
codegen_flags: <defaults>
</compile_context>

<pallas_src>
import functools

import jax
import jax.numpy as jnp
from jax.experimental import pallas as pl
from jax.experimental.pallas import tpu as pltpu


def _splice_kernel(pidx_ref, emb_ref, ctx_ref, out_ref, *, c_blk, n_ctx):
    """One grid step == one block of `c_blk` classes.

    pidx_ref : SMEM int32[padded_n_cls]   scalar-prefetched per-class splice offsets
    emb_ref  : VMEM (c_blk, seq, dim)     frozen token embeddings for this class block
    ctx_ref  : VMEM (n_ctx, dim)          learned context vectors (shared by all classes)
    out_ref  : VMEM (c_blk, seq, dim)     spliced prompts
    """
    blk = pl.program_id(0)

    # Bulk copy of the whole class block: plain vld/vst traffic that hides
    # completely under the HBM DMA (the real bottleneck of this kernel).
    out_ref[...] = emb_ref[...]

    # Learned ctx rows, loaded once per block (tiny: n_ctx x dim).
    ctx_block = ctx_ref[...].astype(out_ref.dtype)

    def body(b, carry):
        # Per-class splice offset (cheap SMEM scalar read), then a single
        # dynamic-slice store of the n_ctx-row ctx band.  No VPU selects,
        # no broadcasts, no large live tiles.
        p = pidx_ref[blk * c_blk + b]
        out_ref[b, pl.ds(p, n_ctx), :] = ctx_block
        return carry

    jax.lax.fori_loop(0, c_blk, body, 0, unroll=True)


def _physical_vmem_bytes():
    try:
        return int(pltpu.get_tpu_info().vmem_capacity_bytes)
    except Exception:
        return 64 * 1024 * 1024  # conservative: v7x per-TensorCore VMEM


def text_prompt_learner_forward(prefix_index, origin_text_embedding, ctx, *, c_blk=None):
    """Pallas implementation of TextPromptLearner.forward().

    prefix_index          : int[n_cls]        (requires prefix_index[i] + n_ctx <= seq_len)
    origin_text_embedding : f32[n_cls, seq_len, ctx_dim]   frozen CLIP token embeddings
    ctx                   : f32[n_ctx, ctx_dim]            learned parameter
    returns               : f32[n_cls, seq_len, ctx_dim]
    """
    n_cls, seq_len, ctx_dim = origin_text_embedding.shape
    n_ctx = ctx.shape[0]
    itemsize = jnp.dtype(origin_text_embedding.dtype).itemsize
    bytes_per_class = seq_len * ctx_dim * itemsize

    vmem_cap = _physical_vmem_bytes()

    if c_blk is None:
        # ~6 MiB per tile reaches ~85% of the HBM roofline (measured on v6e);
        # 4 double-buffered tiles (2 in + 2 out) must stay well inside physical
        # VMEM (v7x: 64 MiB), so cap the total footprint at ~40% of it.
        per_tile_target = 6 * 1024 * 1024
        total_budget = int(0.4 * vmem_cap)
        per_tile = min(per_tile_target, total_budget // 4)
        c_blk = max(1, per_tile // bytes_per_class)
        c_blk = int(min(c_blk, n_cls, 64))  # cap the unrolled inner loop size
        # Keep >= 2 (and an even number of) grid steps so the "parallel" class
        # axis feeds both v7x TensorCores and the pipeline has work to overlap.
        if n_cls > 1:
            nb = pl.cdiv(n_cls, c_blk)
            if nb < 2:
                nb = 2
            elif nb % 2:
                nb += 1
            c_blk = int(pl.cdiv(n_cls, nb))
    num_blocks = int(pl.cdiv(n_cls, c_blk))

    # Pad the offset table so SMEM reads inside a padded last block stay in bounds;
    # Pallas drops writes to the out-of-range rows of a partial class block.
    pidx = prefix_index.astype(jnp.int32)
    pad = num_blocks * c_blk - n_cls
    if pad:
        pidx = jnp.pad(pidx, (0, pad))

    # VMEM limit: at least the double-buffered working set (with slack), but
    # never above what the chip physically has minus ~8 MiB headroom.
    vmem_need = 4 * c_blk * bytes_per_class + 2 * n_ctx * ctx_dim * itemsize
    vmem_limit = max(32 * 1024 * 1024, 2 * vmem_need)
    vmem_limit = int(min(vmem_limit, vmem_cap - 8 * 1024 * 1024))

    kernel = functools.partial(_splice_kernel, c_blk=c_blk, n_ctx=n_ctx)

    return pl.pallas_call(
        kernel,
        out_shape=jax.ShapeDtypeStruct(
            (n_cls, seq_len, ctx_dim), origin_text_embedding.dtype
        ),
        grid_spec=pltpu.PrefetchScalarGridSpec(
            num_scalar_prefetch=1,               # prefix_index -> SMEM
            grid=(num_blocks,),
            in_specs=[
                pl.BlockSpec((c_blk, seq_len, ctx_dim), lambda i, p_ref: (i, 0, 0)),
                pl.BlockSpec((n_ctx, ctx_dim), lambda i, p_ref: (0, 0)),
            ],
            out_specs=pl.BlockSpec((c_blk, seq_len, ctx_dim), lambda i, p_ref: (i, 0, 0)),
        ),
        compiler_params=pltpu.CompilerParams(
            dimension_semantics=("parallel",),   # class blocks are independent (2 TCs on v7x)
            vmem_limit_bytes=vmem_limit,
        ),
    )(pidx, origin_text_embedding, ctx)


def reference_forward(prefix_index, origin_text_embedding, ctx):
    """Pure-JAX reference mirroring the PyTorch forward exactly."""
    n_cls, _, ctx_dim = origin_text_embedding.shape
    n_ctx = ctx.shape[0]
    outs = []
    for i in range(n_cls):
        p = int(prefix_index[i])
        outs.append(
            jnp.concatenate(
                [
                    origin_text_embedding[i, :p],
                    ctx,
                    origin_text_embedding[i, p + n_ctx:],
                ],
                axis=0,
            ).reshape(1, -1, ctx_dim)
        )
    return jnp.concatenate(outs, axis=0)


if __name__ == "__main__":
    # Small synthetic shapes consistent with the module (CLIP-style seq shrunk to 16).
    n_cls, seq_len, ctx_dim, n_ctx = 12, 16, 128, 4

    key = jax.random.PRNGKey(0)
    k_emb, k_ctx = jax.random.split(key)

    # Deterministic "parameters": ctx ~ N(0, 0.02) as in nn.init.normal_,
    # origin_text_embedding stands in for the frozen CLIP token embeddings.
    ctx = 0.02 * jax.random.normal(k_ctx, (n_ctx, ctx_dim), dtype=jnp.float32)
    origin_text_embedding = jax.random.normal(
        k_emb, (n_cls, seq_len, ctx_dim), dtype=jnp.float32
    )
    # prefix_index[i] = name_len[i] + 5 in the original; must satisfy p + n_ctx <= seq_len.
    prefix_index = jnp.array([6, 7, 5, 8, 9, 6, 5, 7, 10, 6, 8, 5], dtype=jnp.int32)

    # TODO(synk): tokenizer / clip.tokenize / token_embedding lookup have no Pallas
    # equivalent here; they are replaced by the deterministic synthetic buffers above.

    # c_blk=5 exercises a multi-block grid with a PARTIAL last block (12 = 5+5+2),
    # validating the padded-pidx / dropped-out-of-range-row behavior.
    out = text_prompt_learner_forward(
        prefix_index, origin_text_embedding, ctx, c_blk=5
    )
    out = jax.block_until_ready(out)

    ref = reference_forward(prefix_index, origin_text_embedding, ctx)

    assert out.shape == (n_cls, seq_len, ctx_dim), out.shape
    assert jnp.allclose(out, ref, atol=1e-6, rtol=1e-6), (
        float(jnp.max(jnp.abs(out - ref)))
    )

    # Also exercise the auto-sized (c_blk=None) path.
    out_auto = jax.block_until_ready(
        text_prompt_learner_forward(prefix_index, origin_text_embedding, ctx)
    )
    assert jnp.allclose(out_auto, ref, atol=1e-6, rtol=1e-6), (
        float(jnp.max(jnp.abs(out_auto - ref)))
    )
    print("KERNEL_OK")
</pallas_src>

<mosaic_0001>
module attributes {stable_mosaic.version = 11 : i64} {
  func.func @_splice_kernel(%arg0: i32, %arg1: memref<15xi32, #tpu.memory_space<smem>>, %arg2: memref<5x16x128xf32, #tpu.memory_space<vmem>>, %arg3: memref<4x128xf32, #tpu.memory_space<vmem>>, %arg4: memref<5x16x128xf32, #tpu.memory_space<vmem>>) attributes {dimension_semantics = [#tpu.dimension_semantics<parallel>], iteration_bounds = array<i64: 3>, scalar_prefetch = 1 : i64, scratch_operands = 0 : i64, tpu.core_type = #tpu.core_type<tc>, window_params = [{transform_indices = @transform_0, window_bounds = array<i64: 5, 16, 128>}, {pipeline_mode = #tpu.pipeline_mode<synchronous>, transform_indices = @transform_1, window_bounds = array<i64: 4, 128>}, {transform_indices = @transform_2, window_bounds = array<i64: 5, 16, 128>}]} {
    %c0 = arith.constant 0 : index
    %c0_0 = arith.constant 0 : index
    %c0_1 = arith.constant 0 : index
    %0 = vector.load %arg2[%c0, %c0_0, %c0_1] : memref<5x16x128xf32, #tpu.memory_space<vmem>>, vector<5x16x128xf32>
    %c0_2 = arith.constant 0 : index
    %c0_3 = arith.constant 0 : index
    %c0_4 = arith.constant 0 : index
    %1 = vector.load %arg4[%c0_2, %c0_3, %c0_4] : memref<5x16x128xf32, #tpu.memory_space<vmem>>, vector<5x16x128xf32>
    tpu.vector_store %arg4[%c0_2, %c0_3, %c0_4], %0 {strides = array<i32>} : memref<5x16x128xf32, #tpu.memory_space<vmem>>, vector<5x16x128xf32>,
    %c0_5 = arith.constant 0 : index
    %c0_6 = arith.constant 0 : index
    %2 = vector.load %arg3[%c0_5, %c0_6] : memref<4x128xf32, #tpu.memory_space<vmem>>, vector<4x128xf32>
    %c0_i32 = arith.constant 0 : i32
    %c5_i32 = arith.constant 5 : i32
    %3 = arith.muli %arg0, %c5_i32 : i32
    %4 = arith.addi %3, %c0_i32 : i32
    %5 = arith.index_cast %4 : i32 to index
    %6 = memref.load %arg1[%5] : memref<15xi32, #tpu.memory_space<smem>>
    %7 = arith.index_cast %c0_i32 : i32 to index
    %8 = arith.index_cast %6 : i32 to index
    %c0_7 = arith.constant 0 : index
    %9 = vector.load %arg4[%7, %8, %c0_7] : memref<5x16x128xf32, #tpu.memory_space<vmem>>, vector<1x4x128xf32>
    %10 = vector.shape_cast %9 : vector<1x4x128xf32> to vector<4x128xf32>
    %11 = vector.shape_cast %2 : vector<4x128xf32> to vector<1x4x128xf32>
    tpu.vector_store %arg4[%7, %8, %c0_7], %11 {strides = array<i32>} : memref<5x16x128xf32, #tpu.memory_space<vmem>>, vector<1x4x128xf32>,
    %c1_i32 = arith.constant 1 : i32
    %c5_i32_8 = arith.constant 5 : i32
    %12 = arith.muli %arg0, %c5_i32_8 : i32
    %13 = arith.addi %12, %c1_i32 : i32
    %14 = arith.index_cast %13 : i32 to index
    %15 = memref.load %arg1[%14] : memref<15xi32, #tpu.memory_space<smem>>
    %16 = arith.index_cast %c1_i32 : i32 to index
    %17 = arith.index_cast %15 : i32 to index
    %c0_9 = arith.constant 0 : index
    %18 = vector.load %arg4[%16, %17, %c0_9] : memref<5x16x128xf32, #tpu.memory_space<vmem>>, vector<1x4x128xf32>
    %19 = vector.shape_cast %18 : vector<1x4x128xf32> to vector<4x128xf32>
    %20 = vector.shape_cast %2 : vector<4x128xf32> to vector<1x4x128xf32>
    tpu.vector_store %arg4[%16, %17, %c0_9], %20 {strides = array<i32>} : memref<5x16x128xf32, #tpu.memory_space<vmem>>, vector<1x4x128xf32>,
    %c2_i32 = arith.constant 2 : i32
    %c5_i32_10 = arith.constant 5 : i32
    %21 = arith.muli %arg0, %c5_i32_10 : i32
    %22 = arith.addi %21, %c2_i32 : i32
    %23 = arith.index_cast %22 : i32 to index
    %24 = memref.load %arg1[%23] : memref<15xi32, #tpu.memory_space<smem>>
    %25 = arith.index_cast %c2_i32 : i32 to index
    %26 = arith.index_cast %24 : i32 to index
    %c0_11 = arith.constant 0 : index
    %27 = vector.load %arg4[%25, %26, %c0_11] : memref<5x16x128xf32, #tpu.memory_space<vmem>>, vector<1x4x128xf32>
    %28 = vector.shape_cast %27 : vector<1x4x128xf32> to vector<4x128xf32>
    %29 = vector.shape_cast %2 : vector<4x128xf32> to vector<1x4x128xf32>
    tpu.vector_store %arg4[%25, %26, %c0_11], %29 {strides = array<i32>} : memref<5x16x128xf32, #tpu.memory_space<vmem>>, vector<1x4x128xf32>,
    %c3_i32 = arith.constant 3 : i32
    %c5_i32_12 = arith.constant 5 : i32
    %30 = arith.muli %arg0, %c5_i32_12 : i32
    %31 = arith.addi %30, %c3_i32 : i32
    %32 = arith.index_cast %31 : i32 to index
    %33 = memref.load %arg1[%32] : memref<15xi32, #tpu.memory_space<smem>>
    %34 = arith.index_cast %c3_i32 : i32 to index
    %35 = arith.index_cast %33 : i32 to index
    %c0_13 = arith.constant 0 : index
    %36 = vector.load %arg4[%34, %35, %c0_13] : memref<5x16x128xf32, #tpu.memory_space<vmem>>, vector<1x4x128xf32>
    %37 = vector.shape_cast %36 : vector<1x4x128xf32> to vector<4x128xf32>
    %38 = vector.shape_cast %2 : vector<4x128xf32> to vector<1x4x128xf32>
    tpu.vector_store %arg4[%34, %35, %c0_13], %38 {strides = array<i32>} : memref<5x16x128xf32, #tpu.memory_space<vmem>>, vector<1x4x128xf32>,
    %c4_i32 = arith.constant 4 : i32
    %c5_i32_14 = arith.constant 5 : i32
    %39 = arith.muli %arg0, %c5_i32_14 : i32
    %40 = arith.addi %39, %c4_i32 : i32
    %41 = arith.index_cast %40 : i32 to index
    %42 = memref.load %arg1[%41] : memref<15xi32, #tpu.memory_space<smem>>
    %43 = arith.index_cast %c4_i32 : i32 to index
    %44 = arith.index_cast %42 : i32 to index
    %c0_15 = arith.constant 0 : index
    %45 = vector.load %arg4[%43, %44, %c0_15] : memref<5x16x128xf32, #tpu.memory_space<vmem>>, vector<1x4x128xf32>
    %46 = vector.shape_cast %45 : vector<1x4x128xf32> to vector<4x128xf32>
    %47 = vector.shape_cast %2 : vector<4x128xf32> to vector<1x4x128xf32>
    tpu.vector_store %arg4[%43, %44, %c0_15], %47 {strides = array<i32>} : memref<5x16x128xf32, #tpu.memory_space<vmem>>, vector<1x4x128xf32>,
    %c5_i32_16 = arith.constant 5 : i32
    return
  }
  func.func @transform_0(%arg0: i32, %arg1: memref<15xi32, #tpu.memory_space<smem>>) -> (i32, i32, i32) {
    %c0_i32 = arith.constant 0 : i32
    %c0_i32_0 = arith.constant 0 : i32
    %c0_i32_1 = arith.constant 0 : i32
    return %arg0, %c0_i32, %c0_i32_0 : i32, i32, i32
  }
  func.func @transform_1(%arg0: i32, %arg1: memref<15xi32, #tpu.memory_space<smem>>) -> (i32, i32) {
    %c0_i32 = arith.constant 0 : i32
    %c0_i32_0 = arith.constant 0 : i32
    %c0_i32_1 = arith.constant 0 : i32
    return %c0_i32, %c0_i32_0 : i32, i32
  }
  func.func @transform_2(%arg0: i32, %arg1: memref<15xi32, #tpu.memory_space<smem>>) -> (i32, i32, i32) {
    %c0_i32 = arith.constant 0 : i32
    %c0_i32_0 = arith.constant 0 : i32
    %c0_i32_1 = arith.constant 0 : i32
    return %arg0, %c0_i32, %c0_i32_0 : i32, i32, i32
  }
}

</mosaic_0001>

<llo_original>
// kernel: tpu_custom_call.1
$region0: #{tpu_custom_call.1}
  #allocation0 [shape = 'u32[]', space=smem, size = 0x4, offset = 0x4, fixed_abs, tag = 'smem constant byte address 0x4 - core index']
  #allocation1 [shape = 'u32[144,128]{1,0:T(1,128)}', space=vmem, size = 0x12000, scoped, tag = 'internal scratch']
  #allocation2 [shape = 's32[1]{0}', space=sflag, size = 0x4, scoped, tag = 'scoped memory for tpu_custom_call.1']
  #allocation3 [shape = 'u8[512]{0}', space=smem, size = 0x200, scoped, tag = 'prefetched SMEM operand 0']
  %s0 = inlined_call_operand.hbm [shape: s32[15], index: 0, kind: input, shape index: {}]
  %s1 = inlined_call_operand.hbm [shape: f32[12,16,128], index: 1, kind: input, shape index: {}]
  %s2 = inlined_call_operand.hbm [shape: f32[4,128], index: 2, kind: input, shape index: {}]
  %s3 = inlined_call_operand.hbm [shape: f32[12,16,128], index: 3, kind: output, shape index: {}]
  %s4 = sld [smem:[#allocation0]]
  $region49: #{tpu_custom_call.1} parent=0
    _
  %s6 = ssub.s32 1, %s4
  %s7 = scalar_select 0, %s6, %s4
  %9 = dma.hbm_to_smem %s0, 16, [#allocation3], [#allocation2]
  %10 = dma.done [#allocation2], 16
  %11 = sfence
  $region1: #{tpu_custom_call.1} parent=0
    #allocation4 [shape = 'u8[81920]{0}', space=vmem, size = 0x14000, scoped, tag = 'input window, operand 1']
    #allocation5 [shape = 's32[2]{0}', space=sflag, size = 0x8, scoped, tag = 'scoped memory for tpu_custom_call.1']
    #allocation6 [shape = 's32[2]{0}', space=sflag, size = 0x8, scoped, tag = 'scoped memory for tpu_custom_call.1']
    #allocation7 [shape = 'u8[2048]{0}', space=vmem, size = 0x800, scoped, tag = 'input window, operand 2, single buffered']
    #allocation8 [shape = 's32[1]{0}', space=sflag, size = 0x4, scoped, tag = 'scoped memory for tpu_custom_call.1']
    #allocation9 [shape = 'u8[81920]{0}', space=vmem, size = 0x14000, scoped, tag = 'output window, operand 0']
    %12 = vsyncpa [#allocation5], 0
    %s13 = scalar_lea.sflag [#allocation5], 1
    %14 = vsyncpa %s13, 0
    %15 = vsyncpa [#allocation8], 0
    %16 = vsyncpa [#allocation6], 0
    %s17 = scalar_lea.sflag [#allocation6], 1
    %18 = vsyncpa %s17, 0
    loop: start=0, step=1, limit=5
    $region2: #{tpu_custom_call.1} parent=1 // loop_pre_header
      _
    $region3: #{tpu_custom_call.1} parent=1 // loop_header
      %s20 = sphi 0, %s24
      %p21 = scmp.ge.s32.totalorder %s20, 5
      %s30 = sphi 0, %s32
      %s33 = sphi 0, %s30
      %s34 = sphi 0, %s33
      %s50 = sphi 0, %s34
      %s54 = sphi 0, %s54
      %s56 = sphi 0, %s54
      %s57 = sphi 0, %s56
      %s71 = sphi 0, %s57
      %s77 = sphi 0, %s79
      %s80 = sphi 0, %s77
      %s81 = sphi 0, %s80
      %s97 = sphi 0, %s81
    $region4: #{tpu_custom_call.1} parent=1 // loop_header_branch
      %23 = sbr.rel (%p21) target = $region8
    $region5: #{tpu_custom_call.1} parent=1 // loop_body
      %s25 = ssub.s32 %s20, 1
      %s26 = ssub.s32 %s20, 2
      %s27 = sadd.s32 %s20, 1
      %s28 = ssub.s32 %s20, %s27
      %p29 = scmp.eq.s32.totalorder %s28, 0
      %s31 = sadd.s32 %s30, 1
      %s32 = scalar_select %p29, %s30, %s31
      %p35 = pneg %p29
      %p36 = scmp.eq.s32.totalorder %s20, 2
      %p37 = por %p35, %p36
      %p38 = scmp.ne.s32.totalorder %s30, %s33
      %p39 = scmp.eq.s32.totalorder %s20, 0
      %p40 = por %p38, %p39
      %p41 = scmp.ne.s32.totalorder %s30, %s33
      %p42 = scmp.eq.s32.totalorder %s25, 2
      %p43 = por %p41, %p42
      %p44 = scmp.ne.s32.totalorder %s33, %s34
      %p45 = scmp.eq.s32.totalorder %s25, 0
      %p46 = por %p44, %p45
      %p47 = scmp.ne.s32.totalorder %s33, %s34
      %p48 = scmp.eq.s32.totalorder %s26, 2
      %p49 = por %p47, %p48
      %p51 = scmp.ne.s32.totalorder %s34, %s50
      %p52 = scmp.eq.s32.totalorder %s26, 0
      %p53 = por %p51, %p52
      %s55 = sadd.s32 %s54, 1
      %p58 = scmp.eq.s32.totalorder %s20, 2
      %p59 = scmp.ne.s32.totalorder %s54, %s56
      %p60 = scmp.eq.s32.totalorder %s20, 0
      %p61 = por %p59, %p60
      %p62 = scmp.ne.s32.totalorder %s54, %s56
      %p63 = scmp.eq.s32.totalorder %s25, 2
      %p64 = por %p62, %p63
      %p65 = scmp.ne.s32.totalorder %s56, %s57
      %p66 = scmp.eq.s32.totalorder %s25, 0
      %p67 = por %p65, %p66
      %p68 = scmp.ne.s32.totalorder %s56, %s57
      %p69 = scmp.eq.s32.totalorder %s26, 2
      %p70 = por %p68, %p69
      %p72 = scmp.ne.s32.totalorder %s57, %s71
      %p73 = scmp.eq.s32.totalorder %s26, 0
      %p74 = por %p72, %p73
      %s75 = ssub.s32 %s20, %s27
      %p76 = scmp.eq.s32.totalorder %s75, 0
      %s78 = sadd.s32 %s77, 1
      %s79 = scalar_select %p76, %s77, %s78
      %p82 = pneg %p76
      %p83 = scmp.eq.s32.totalorder %s20, 2
      %p84 = por %p82, %p83
      %p85 = scmp.ne.s32.totalorder %s77, %s80
      %p86 = scmp.eq.s32.totalorder %s20, 0
      %p87 = por %p85, %p86
      %p88 = scmp.ne.s32.totalorder %s77, %s80
      %p89 = scmp.eq.s32.totalorder %s25, 2
      %p90 = por %p88, %p89
      %p91 = scmp.ne.s32.totalorder %s80, %s81
      %p92 = scmp.eq.s32.totalorder %s25, 0
      %p93 = por %p91, %p92
      %p94 = scmp.ne.s32.totalorder %s80, %s81
      %p95 = scmp.eq.s32.totalorder %s26, 2
      %p96 = por %p94, %p95
      %p98 = scmp.ne.s32.totalorder %s81, %s97
      %p99 = scmp.eq.s32.totalorder %s26, 0
      %p100 = por %p98, %p99
      %p101 = scmp.le.s32.totalorder 1, %s20
      %p102 = scmp.lt.s32.totalorder %s20, 4
      %p103 = pnand %p101, %p102
      %p104 = pneg %p103
      // Predicated region
      $region9: #{tpu_custom_call.1} parent=5 // pred_check
        _
      $region10: #{tpu_custom_call.1} parent=5 // pred_check_branch
        %106 = sbr.rel (%p103) target = $region12
      $region11: #{tpu_custom_call.1} parent=5 // pred_region
        %s107 = ssub.s32 %s20, 1
        // Predicated region
        $region13: #{tpu_custom_call.1} parent=11 // pred_check
          %p108 = pneg %p67
        $region14: #{tpu_custom_call.1} parent=11 // pred_check_branch
          %110 = sbr.rel (%p108) target = $region16
        $region15: #{tpu_custom_call.1} parent=11 // pred_region
          %s112 = ssub.s32 64, 64
          %113 = vsyncadd [#allocation8], %s112
          %s115 = sshll.u32 [#allocation7], 4
          %s116 = int_to_ptr.vmem [resolvable:$true] %s115
          %118 = dma.hbm_to_vmem [thread:$0]  %s2, 64, %s116, [#allocation8]
        $region16: #{tpu_custom_call.1} parent=11 // pred_fallthru
          _
      $region12: #{tpu_custom_call.1} parent=5 // pred_fallthru
        _
      %p119 = scmp.lt.s32.totalorder %s20, 3
      // Predicated region
      $region17: #{tpu_custom_call.1} parent=5 // pred_check
        %p120 = pneg %p119
      $region18: #{tpu_custom_call.1} parent=5 // pred_check_branch
        %122 = sbr.rel (%p120) target = $region20
      $region19: #{tpu_custom_call.1} parent=5 // pred_region
        // Predicated region
        $region21: #{tpu_custom_call.1} parent=19 // pred_check
          %p123 = pneg %p40
        $region22: #{tpu_custom_call.1} parent=19 // pred_check_branch
          %125 = sbr.rel (%p123) target = $region24
        $region23: #{tpu_custom_call.1} parent=19 // pred_region
          %s126 = sand.u32 %s30, 1
          %s127 = scalar_lea.sflag [#allocation5], %s126
          %s128 = sand.u32 %s30, 1
          %s129 = smul.addr %s128, 80
          %s130 = scalar_lea.vmem [#allocation4], %s129
          %s131 = smul.u32 5, %s20
          %s132 = ssub.s32 12, %s131
          %p133 = scmp.lt.s32.totalorder %s132, 5
          %s134 = scalar_select %p133, %s132, 5
          %s135 = smul.u32 128, %s134
          %s136 = smul.u32 %s135, 2
          %s138 = ssub.s32 1280, %s136
          %139 = vsyncadd %s127, %s138
          %p140 = scmp.ne.s32.totalorder 0, %s136
          %s141 = smul.addr %s131, 2
          %s142 = smul.addr %s141, 128
          %s143 = scalar_lea.hbm %s1, %s142
          %s144 = smul.u32 %s134, 2
          %s145 = smul.u32 8, %s144
          %s146 = sshll.u32 %s130, 4
          %s147 = int_to_ptr.vmem [resolvable:$true] %s146
          %s148 = sshll.u32 %s145, 4
          %152 = dma.hbm_to_vmem [thread:$0]  (%p140), %s143, %s148, %s147, %s127, 128, 128, 8
        $region24: #{tpu_custom_call.1} parent=19 // pred_fallthru
          _
      $region20: #{tpu_custom_call.1} parent=5 // pred_fallthru
        _
      %p153 = scmp.le.s32.totalorder 1, %s20
      %p154 = scmp.lt.s32.totalorder %s20, 4
      %p155 = pnand %p153, %p154
      %p156 = pneg %p155
      // Predicated region
      $region25: #{tpu_custom_call.1} parent=5 // pred_check
        _
      $region26: #{tpu_custom_call.1} parent=5 // pred_check_branch
        %158 = sbr.rel (%p155) target = $region28
      $region27: #{tpu_custom_call.1} parent=5 // pred_region
        %s159 = ssub.s32 %s20, 1
        %s160 = sand.u32 %s33, 1
        %s161 = scalar_lea.sflag [#allocation5], %s160
        %s162 = sand.u32 %s33, 1
        %s163 = smul.addr %s162, 80
        %s164 = scalar_lea.vmem [#allocation4], %s163
        // Predicated region
        $region29: #{tpu_custom_call.1} parent=27 // pred_check
          %p165 = pneg %p46
        $region30: #{tpu_custom_call.1} parent=27 // pred_check_branch
          %167 = sbr.rel (%p165) target = $region32
        $region31: #{tpu_custom_call.1} parent=27 // pred_region
          %168 = dma.done %s161, 1280
        $region32: #{tpu_custom_call.1} parent=27 // pred_fallthru
          _
        // Predicated region
        $region33: #{tpu_custom_call.1} parent=27 // pred_check
          %p169 = pneg %p67
        $region34: #{tpu_custom_call.1} parent=27 // pred_check_branch
          %171 = sbr.rel (%p169) target = $region36
        $region35: #{tpu_custom_call.1} parent=27 // pred_region
          %172 = dma.done [#allocation8], 64
        $region36: #{tpu_custom_call.1} parent=27 // pred_fallthru
          _
        %s173 = sand.u32 %s33, 1
        %s174 = scalar_lea.sflag [#allocation5], %s173
        %s175 = sand.u32 %s33, 1
        %s176 = smul.addr %s175, 80
        %s177 = scalar_lea.vmem [#allocation4], %s176
        %p178 = pneg %p46
        %p179 = pneg %p43
        %p180 = pneg %p67
        %p181 = pneg %p64
        %p182 = pneg %p93
        %p183 = pneg %p90
        %s184 = sand.u32 %s80, 1
        %s185 = scalar_lea.sflag [#allocation6], %s184
        %s186 = sand.u32 %s80, 1
        %s187 = smul.addr %s186, 80
        %s188 = scalar_lea.vmem [#allocation9], %s187
        %s189 = smul.u32 5, %s25
        %s190 = ssub.s32 12, %s189
        %p191 = scmp.lt.s32.totalorder %s190, 5
        %s192 = scalar_select %p191, %s190, 5
        %s193 = smul.u32 128, %s192
        %s194 = smul.u32 %s193, 2
        %s195 = smul.u32 5, %s25
        %s196 = ssub.s32 12, %s195
        %p197 = scmp.lt.s32.totalorder %s196, 5
        %s198 = scalar_select %p197, %s196, 5
        %s199 = smul.u32 128, %s198
        %s200 = smul.u32 %s199, 2
        %v201 = vld [vmem:[%s164] sm:$0xff]
        %v202 = vld [vmem:[%s164 + $0x8] sm:$0xff]
        %v203 = vld [vmem:[%s164 + $0x10] sm:$0xff]
        %v204 = vld [vmem:[%s164 + $0x18] sm:$0xff]
        %v205 = vld [vmem:[%s164 + $0x20] sm:$0xff]
        %v206 = vld [vmem:[%s164 + $0x28] sm:$0xff]
        %v207 = vld [vmem:[%s164 + $0x30] sm:$0xff]
        %v208 = vld [vmem:[%s164 + $0x38] sm:$0xff]
        %v209 = vld [vmem:[%s164 + $0x40] sm:$0xff]
        %v210 = vld [vmem:[%s164 + $0x48] sm:$0xff]
        %211 = vst [vmem:[%s188] sm:$0xff] %v201
        %212 = vst [vmem:[%s188 + $0x8] sm:$0xff] %v202
        %213 = vst [vmem:[%s188 + $0x10] sm:$0xff] %v203
        %214 = vst [vmem:[%s188 + $0x18] sm:$0xff] %v204
        %215 = vst [vmem:[%s188 + $0x20] sm:$0xff] %v205
        %216 = vst [vmem:[%s188 + $0x28] sm:$0xff] %v206
        %217 = vst [vmem:[%s188 + $0x30] sm:$0xff] %v207
        %218 = vst [vmem:[%s188 + $0x38] sm:$0xff] %v208
        %219 = vst [vmem:[%s188 + $0x40] sm:$0xff] %v209
        %220 = vst [vmem:[%s188 + $0x48] sm:$0xff] %v210
        %v221 = vld [vmem:[#allocation7] sm:$0xf]
        %s222 = smul.u32 %s25, 5
        %s223 = sld [smem:[#allocation3 + %s222]]
        %s224 = scalar_lea.vmem %s188, %s223 [#allocation9]
        %225 = vst [vmem:[%s224] sm:$0xf] %v221
        %s226 = sadd.s32 %s222, 1
        %s227 = sld [smem:[#allocation3 + %s226]]
        %s228 = sadd.s32 %s227, 16
        %s229 = scalar_lea.vmem %s188, %s228 [#allocation9]
        %230 = vst [vmem:[%s229] sm:$0xf] %v221
        %s231 = sadd.s32 %s222, 2
        %s232 = sld [smem:[#allocation3 + %s231]]
        %s233 = sadd.s32 %s232, 32
        %s234 = scalar_lea.vmem %s188, %s233 [#allocation9]
        %235 = vst [vmem:[%s234] sm:$0xf] %v221
        %s236 = sadd.s32 %s222, 3
        %s237 = sld [smem:[#allocation3 + %s236]]
        %s238 = sadd.s32 %s237, 48
        %s239 = scalar_lea.vmem %s188, %s238 [#allocation9]
        %240 = vst [vmem:[%s239] sm:$0xf] %v221
        %s241 = sadd.s32 %s222, 4
        %s242 = sld [smem:[#allocation3 + %s241]]
        %s243 = sadd.s32 %s242, 64
        %s244 = scalar_lea.vmem %s188, %s243 [#allocation9]
        %245 = vst [vmem:[%s244] sm:$0xf] %v221
        %s246 = sand.u32 %s80, 1
        %s247 = scalar_lea.sflag [#allocation6], %s246
        %s248 = sand.u32 %s80, 1
        %s249 = smul.addr %s248, 80
        %s250 = scalar_lea.vmem [#allocation9], %s249
        // Predicated region
        $region37: #{tpu_custom_call.1} parent=27 // pred_check
          %p251 = pneg %p90
        $region38: #{tpu_custom_call.1} parent=27 // pred_check_branch
          %253 = sbr.rel (%p251) target = $region40
        $region39: #{tpu_custom_call.1} parent=27 // pred_region
          %s254 = smul.u32 5, %s25
          %s255 = ssub.s32 12, %s254
          %p256 = scmp.lt.s32.totalorder %s255, 5
          %s257 = scalar_select %p256, %s255, 5
          %s258 = smul.u32 128, %s257
          %s259 = smul.u32 %s258, 2
          %s261 = ssub.s32 1280, %s259
          %262 = vsyncadd %s247, %s261
          %p263 = scmp.ne.s32.totalorder 0, %s259
          %s264 = smul.addr %s254, 2
          %s265 = smul.addr %s264, 128
          %s266 = scalar_lea.hbm %s3, %s265
          %s267 = smul.u32 %s257, 2
          %s268 = smul.u32 8, %s267
          %s269 = sshll.u32 %s250, 4
          %s270 = int_to_ptr.vmem [resolvable:$true] %s269
          %s271 = sshll.u32 %s268, 4
          %275 = dma.vmem_to_hbm [thread:$0]  (%p263), %s270, %s271, %s266, %s247, 128, 128, 8
        $region40: #{tpu_custom_call.1} parent=27 // pred_fallthru
          _
      $region28: #{tpu_custom_call.1} parent=5 // pred_fallthru
        _
      %p276 = scmp.le.s32.totalorder 2, %s20
      // Predicated region
      $region41: #{tpu_custom_call.1} parent=5 // pred_check
        %p277 = pneg %p276
      $region42: #{tpu_custom_call.1} parent=5 // pred_check_branch
        %279 = sbr.rel (%p277) target = $region44
      $region43: #{tpu_custom_call.1} parent=5 // pred_region
        %s280 = ssub.s32 %s20, 2
        // Predicated region
        $region45: #{tpu_custom_call.1} parent=43 // pred_check
          %p281 = pneg %p96
        $region46: #{tpu_custom_call.1} parent=43 // pred_check_branch
          %283 = sbr.rel (%p281) target = $region48
        $region47: #{tpu_custom_call.1} parent=43 // pred_region
          %s284 = sand.u32 %s81, 1
          %s285 = scalar_lea.sflag [#allocation6], %s284
          %s286 = sand.u32 %s81, 1
          %s287 = smul.addr %s286, 80
          %s288 = scalar_lea.vmem [#allocation9], %s287
          %289 = dma.done %s285, 1280
        $region48: #{tpu_custom_call.1} parent=43 // pred_fallthru
          _
      $region44: #{tpu_custom_call.1} parent=5 // pred_fallthru
        _
    $region6: #{tpu_custom_call.1} parent=1 // loop_footer
      %s24 = sadd.s32 1, %s20
    $region7: #{tpu_custom_call.1} parent=1 // loop_footer_branch
      %19 = sbr.rel target = $region3
    $region8: #{tpu_custom_call.1} parent=1 // loop_exit
      _
    %290 = vsyncpa [#allocation5], 1
    %s291 = scalar_lea.sflag [#allocation5], 1
    %292 = vsyncpa %s291, 1
    %293 = vsyncpa [#allocation8], 1
    %294 = vsyncpa [#allocation6], 1
    %s295 = scalar_lea.sflag [#allocation6], 1
    %296 = vsyncpa %s295, 1

</llo_original>
